<compile_context>
chip_gen: v7x
topology: tpu7x:2x2x1
jax: 0.10.0
libtpu: 0.0.40
codegen_flags: <defaults>
</compile_context>

<pallas_src>
import functools

import numpy as np
import jax
import jax.numpy as jnp
from jax import lax
from jax.experimental import pallas as pl
from jax.experimental.pallas import tpu as pltpu


# ---------------------------------------------------------------------------
# Plain-JAX glue: TF "SAME" padding, Unfold-style patch extraction, TF-style
# nearest-neighbor downsampling (align_corners=True).
# ---------------------------------------------------------------------------
def _same_pad_amounts(H, W, kh, kw, sh, sw, rh=1, rw=1):
    out_h = -(-H // sh)
    out_w = -(-W // sw)
    fh = (kh - 1) * rh + 1
    fw = (kw - 1) * rw + 1
    pah = max((out_h - 1) * sh + fh - H, 0)
    paw = max((out_w - 1) * sw + fw - W, 0)
    return pah // 2, pah - pah // 2, paw // 2, paw - paw // 2


def _same_pad(x, kh, kw, sh, sw):
    H, W = x.shape[2], x.shape[3]
    pt, pb, pleft, pright = _same_pad_amounts(H, W, kh, kw, sh, sw)
    return jnp.pad(x, ((0, 0), (0, 0), (pt, pb), (pleft, pright)))


def _extract_patches(x, kh, kw, sh, sw):
    # x: (N, C, Hp, Wp) already padded.  returns (N, L, C, kh, kw)
    N, C, Hp, Wp = x.shape
    oh = (Hp - kh) // sh + 1
    ow = (Wp - kw) // sw + 1
    cols = []
    for a in range(kh):
        for c in range(kw):
            cols.append(x[:, :, a:a + (oh - 1) * sh + 1:sh,
                            c:c + (ow - 1) * sw + 1:sw])
    p = jnp.stack(cols, axis=-1)               # (N, C, oh, ow, kh*kw)
    p = p.transpose(0, 2, 3, 1, 4)             # (N, oh, ow, C, kh*kw)
    return p.reshape(N, oh * ow, C, kh, kw)


def _downsample_nn_tf(x, n):
    if n == 1:
        return x
    H, W = x.shape[2], x.shape[3]
    hi = np.floor(np.linspace(0.0, H - 1, H // n) + 0.5).astype(np.int32)
    wi = np.floor(np.linspace(0.0, W - 1, W // n) + 0.5).astype(np.int32)
    return x[:, :, hi, :][:, :, :, wi]


def _diag3(y):
    # reference-path helper: conv2d with eye(3) and SAME padding on the
    # flattened score matrix == zero-padded 3-tap diagonal sum.
    P, Q = y.shape
    yp = jnp.pad(y, ((1, 1), (1, 1)))
    return yp[0:P, 0:Q] + yp[1:P + 1, 1:Q + 1] + yp[2:P + 2, 2:Q + 2]


def _round_up(x, m):
    return ((x + m - 1) // m) * m


def _mxu_lane_align():
    # v6e/v7x MXUs are 2x(256x256): 256-wide result tiles fill the systolic
    # array.  Older generations (<= v5e) use 128x128 tiles -> keep 128.
    try:
        kind = jax.devices()[0].device_kind.lower()
    except Exception:
        return 128
    return 256 if ("v6" in kind or "v7" in kind) else 128


# ---------------------------------------------------------------------------
# Pallas kernels.
# ---------------------------------------------------------------------------
def _diag3_inkernel(y, ri, ci):
    # zero-padded 3-tap diagonal sum on a VMEM-resident (R, C) value:
    # out[i, j] = y[i-1, j-1] + y[i, j] + y[i+1, j+1]
    # XLU rolls + VPU masks; ri/ci iotas are built once by the caller.
    R, C = y.shape
    dn = pltpu.roll(pltpu.roll(y, 1, axis=0), 1, axis=1)          # y[i-1, j-1]
    dn = jnp.where((ri == 0) | (ci == 0), 0.0, dn)
    up = pltpu.roll(pltpu.roll(y, R - 1, axis=0), C - 1, axis=1)  # y[i+1, j+1]
    up = jnp.where((ri == R - 1) | (ci == C - 1), 0.0, up)
    return y + dn + up


def _score_fuse_kernel(scale, fuse, fp_ref, wpT_ref, inv_ref, s_ref):
    # fp_ref : (1, Lf, Kp)        foreground 3x3 patches (K zero-padded)
    # wpT_ref: (1, Kp, Lbp)       background 3x3 patches, pre-transposed
    # inv_ref: (1, 1, Lbp)  f32   1/max(||w||,1e-4) per bg patch, 0 on padding
    # s_ref  : (1, Lf, Lbp) f32   scaled cosine scores after the 1st diag3
    s = jnp.dot(fp_ref[0], wpT_ref[0], preferred_element_type=jnp.float32)
    # norm + softmax scale applied post-matmul (commutes with the contraction
    # and with the linear diag3); padded columns stay exactly 0 (inv == 0).
    s = s * (inv_ref[0] * jnp.float32(scale))
    if fuse:
        ri = lax.broadcasted_iota(jnp.int32, s.shape, 0)
        ci = lax.broadcasted_iota(jnp.int32, s.shape, 1)
        s = _diag3_inkernel(s, ri, ci)
    s_ref[0] = s


def _softmax_attend_kernel(fuse, lb_real, sp_ref, mm_ref, rp_ref, z_ref):
    # sp_ref: (1, Lf, Lbp) f32    scores in permuted (lf', lb') order
    # mm_ref: (1, 1, Lbp)  f32    bg-patch validity (permuted, 0 on padding)
    # rp_ref: (1, Lbp, Kr)  bf16  raw 4x4 patches (permuted, padded K)
    # z_ref : (1, Lf, Kr)   bf16  attention-weighted patch sum (permuted lf')
    s = sp_ref[0]                                              # (Lf, Lbp)
    ci = lax.broadcasted_iota(jnp.int32, s.shape, 1)           # shared mask iota
    if fuse:
        ri = lax.broadcasted_iota(jnp.int32, s.shape, 0)
        s = _diag3_inkernel(s, ri, ci)                         # 2nd fuse pass
    mm = mm_ref[0]                                             # (1, Lbp)
    # DeepFill semantics: invalid (mm==0) columns get score 0 (still in the
    # softmax denominator), then are removed from the numerator post-softmax.
    s = s * mm
    # exclude padded background columns from the softmax entirely
    s = jnp.where(ci < lb_real, s, jnp.float32(-1e30))
    m = jnp.max(s, axis=1, keepdims=True)                      # (Lf, 1)
    e = jnp.exp(s - m)
    denom = jnp.sum(e, axis=1, keepdims=True)                  # (Lf, 1)
    em = (e * mm).astype(jnp.bfloat16)                         # post-softmax mask
    # bf16 MXU matmul with f32 accumulation; normalize AFTER the contraction.
    z = jnp.dot(em, rp_ref[0], preferred_element_type=jnp.float32)   # (Lf, Kr)
    z_ref[0] = (z * pl.reciprocal(denom, approx=True)).astype(jnp.bfloat16)


def _vmem_limit(block_bytes):
    # double-buffered blocks + generous headroom for (Lf, Lbp) temporaries,
    # clamped to 64 MiB so the same setting is legal on v7x.
    return int(min(max(2 * block_bytes, 32 * 2 ** 20), 64 * 2 ** 20))


def _score_fuse_pallas(fp, wpT, inv, scale, fuse):
    N, Lf, Kp = fp.shape
    Lbp = wpT.shape[2]
    isz = fp.dtype.itemsize
    est = 2 * (Lf * Kp * isz + Kp * Lbp * isz + Lbp * 4 + Lf * Lbp * 4) \
        + 6 * Lf * Lbp * 4
    kern = functools.partial(_score_fuse_kernel, float(scale), bool(fuse))
    # TODO(synk): for very large feature maps, tile the Lf axis here (rows are
    # independent except for the 1-row diag3 halo) so blocks fit v7x VMEM and
    # the grid pipelines even when N == 1.
    return pl.pallas_call(
        kern,
        out_shape=jax.ShapeDtypeStruct((N, Lf, Lbp), jnp.float32),
        grid=(N,),
        in_specs=[
            pl.BlockSpec((1, Lf, Kp), lambda n: (n, 0, 0)),
            pl.BlockSpec((1, Kp, Lbp), lambda n: (n, 0, 0)),
            pl.BlockSpec((1, 1, Lbp), lambda n: (n, 0, 0)),
        ],
        out_specs=pl.BlockSpec((1, Lf, Lbp), lambda n: (n, 0, 0)),
        compiler_params=pltpu.CompilerParams(
            dimension_semantics=("parallel",),
            vmem_limit_bytes=_vmem_limit(est)),
    )(fp, wpT, inv)


def _softmax_attend_pallas(sp, mmp, rpp, fuse, lb_real):
    N, Lf, Lbp = sp.shape
    Kr = rpp.shape[2]
    est = 2 * (Lf * Lbp * 4 + Lbp * 4 + Lbp * Kr * 2 + Lf * Kr * 2) \
        + 6 * Lf * Lbp * 4
    kern = functools.partial(_softmax_attend_kernel, bool(fuse), int(lb_real))
    # NOTE: mmp is the only grid-invariant input left and is a single (1, Lbp)
    # row, so default double-buffering wastes a negligible amount of VMEM.
    return pl.pallas_call(
        kern,
        out_shape=jax.ShapeDtypeStruct((N, Lf, Kr), jnp.bfloat16),
        grid=(N,),
        in_specs=[
            pl.BlockSpec((1, Lf, Lbp), lambda n: (n, 0, 0)),
            pl.BlockSpec((1, 1, Lbp), lambda n: (0, 0, 0)),
            pl.BlockSpec((1, Lbp, Kr), lambda n: (n, 0, 0)),
        ],
        out_specs=pl.BlockSpec((1, Lf, Kr), lambda n: (n, 0, 0)),
        compiler_params=pltpu.CompilerParams(
            dimension_semantics=("parallel",),
            vmem_limit_bytes=_vmem_limit(est)),
    )(sp, mmp, rpp)


# ---------------------------------------------------------------------------
# Overlap-add fold: == F.conv_transpose2d(p, raw_w, stride=rate, padding=1)/4,
# collapsed to 4 dense quadrant passes (kernel/stride == 2 since kernel=2*rate).
# ---------------------------------------------------------------------------
def _fold_overlap_add(Z, N, C, Hf, Wf, rate, kernel):
    # TODO(synk): this fold could also be accumulated in-kernel into a
    # (C, out_h, out_w) VMEM scratch to remove the (N, Lf, Kr) HBM round trip.
    Z6 = Z.reshape(N, Hf, Wf, C, kernel, kernel)
    out_h = (Hf - 1) * rate + kernel
    out_w = (Wf - 1) * rate + kernel
    full = jnp.zeros((N, C, out_h, out_w), jnp.float32)
    for qa in range(2):
        for qc in range(2):
            quad = Z6[:, :, :, :, qa * rate:(qa + 1) * rate,
                                  qc * rate:(qc + 1) * rate]
            quad = quad.transpose(0, 3, 1, 4, 2, 5).reshape(
                N, C, rate * Hf, rate * Wf)
            full = full.at[:, :, qa * rate:qa * rate + rate * Hf,
                                 qc * rate:qc * rate + rate * Wf].add(quad)
    return full[:, :, 1:out_h - 1, 1:out_w - 1] / 4.0


# ---------------------------------------------------------------------------
# Full forward pass (return_flow=False path)
# ---------------------------------------------------------------------------
def contextual_attention_forward(f, b, mask=None, *, ksize=3, stride=1, rate=2,
                                 fuse_k=3, softmax_scale=10.0, n_down=2,
                                 fuse=True, use_pallas=True,
                                 score_dtype=jnp.float32):
    # score_dtype=jnp.bfloat16 enables the ~3x-faster bf16 score matmul (f32
    # accumulation); kept f32 by default because scale=10 + the two fuse
    # passes make the softmax sharp enough that score-input rounding can flip
    # near-tied argmax winners (visible in the final output).
    f = f.astype(jnp.float32)
    b = b.astype(jnp.float32)
    N, C, H, W = f.shape
    kernel = 2 * rate

    # raw background patches (weights of the final transposed conv)
    b_pad_raw = _same_pad(b, kernel, kernel, rate * stride, rate * stride)
    raw_p = _extract_patches(b_pad_raw, kernel, kernel,
                             rate * stride, rate * stride)       # (N, Lb, C, ker, ker)

    # nearest-neighbor (TF align_corners) downsampling of f and b
    f_ds = _downsample_nn_tf(f, rate)
    b_ds = _downsample_nn_tf(b, rate)
    Hf, Wf = f_ds.shape[2:]
    Hb, Wb = b_ds.shape[2:]
    Lf, Lb = Hf * Wf, Hb * Wb

    # background matching patches (3x3) and foreground receptive fields
    b_pad = _same_pad(b_ds, ksize, ksize, stride, stride)
    w_p = _extract_patches(b_pad, ksize, ksize, stride, stride)  # (N, Lb, C, k, k)
    f_pad = _same_pad(f_ds, ksize, ksize, 1, 1)
    f_p = _extract_patches(f_pad, ksize, ksize, 1, 1)            # (N, Lf, C, k, k)

    # mask -> per-background-patch validity multiplier (batch 0 only, as in torch)
    if mask is None:
        mask_ds = jnp.zeros((N, 1, Hb, Wb), jnp.float32)
    else:
        mask_ds = _downsample_nn_tf(mask.astype(jnp.float32), (2 ** n_down) * rate)
    m_pad = _same_pad(mask_ds, ksize, ksize, stride, stride)
    m_p = _extract_patches(m_pad, ksize, ksize, stride, stride)[0]   # (Lb, 1, k, k)
    mm = (jnp.mean(m_p, axis=(1, 2, 3)) == 0.0).astype(jnp.float32)  # (Lb,)

    K9 = C * ksize * ksize
    K16 = C * kernel * kernel
    fp = f_p.reshape(N, Lf, K9)
    wp = w_p.reshape(N, Lb, K9)
    rp = raw_p.reshape(N, Lb, K16)

    if use_pallas:
        Kp = _round_up(K9, 128)
        Kr = _round_up(K16, 128)
        Lbp = _round_up(Lb, _mxu_lane_align())

        # exact (f32) per-bg-patch inverse norm, 0 on padded columns
        inv_norm = 1.0 / jnp.maximum(jnp.sqrt(jnp.sum(wp * wp, axis=2)), 1e-4)
        inv_norm = jnp.pad(inv_norm, ((0, 0), (0, Lbp - Lb)))[:, None, :]

        fp_pad = jnp.pad(fp, ((0, 0), (0, 0), (0, Kp - K9))).astype(score_dtype)
        wpT = jnp.pad(wp, ((0, 0), (0, Lbp - Lb), (0, Kp - K9))
                      ).transpose(0, 2, 1).astype(score_dtype)      # (N, Kp, Lbp)

        # kernel 1: score matmul + norm/scale + 1st diag3 (scores stay f32)
        s1 = _score_fuse_pallas(fp_pad, wpT, inv_norm, softmax_scale, fuse)
        s1 = s1[:, :, :Lb]                                          # (N, Lf, Lb)

        # host-side O(L^2) reindex (hf,wf)x(hb,wb) -> (wf,hf)x(wb,hb)
        if fuse:
            s1 = s1.reshape(N, Hf, Wf, Hb, Wb).transpose(0, 2, 1, 4, 3
                                                         ).reshape(N, Lf, Lb)
            rp_p = rp.reshape(N, Hb, Wb, K16).transpose(0, 2, 1, 3
                                                        ).reshape(N, Lb, K16)
            mm_p = mm.reshape(Hb, Wb).T.reshape(-1)
        else:
            rp_p, mm_p = rp, mm

        sp = jnp.pad(s1, ((0, 0), (0, 0), (0, Lbp - Lb)))           # (N, Lf, Lbp)
        rpp = jnp.pad(rp_p, ((0, 0), (0, Lbp - Lb), (0, Kr - K16))
                      ).astype(jnp.bfloat16)                        # (N, Lbp, Kr)
        mmp = jnp.pad(mm_p, (0, Lbp - Lb)).reshape(1, 1, Lbp)

        # kernel 2: 2nd diag3 + masked softmax + bf16 attend
        z = _softmax_attend_pallas(sp, mmp, rpp, fuse, Lb)          # (N, Lf, Kr) bf16
        z = z[..., :K16].astype(jnp.float32)
        if fuse:
            z = z.reshape(N, Wf, Hf, K16).transpose(0, 2, 1, 3).reshape(N, Lf, K16)
        Z = z
    else:
        # pure-JAX reference of the original math (original orientation/order)
        denom = jnp.maximum(jnp.sqrt(jnp.sum(wp * wp, axis=2, keepdims=True)), 1e-4)
        scores = jnp.einsum('nlk,nqk->nlq', wp / denom, fp)            # (N, Lb, Lf)
        if fuse:
            def fuse_one(y):
                y1 = _diag3(y)
                y1 = y1.reshape(Hb, Wb, Hf, Wf).transpose(1, 0, 3, 2).reshape(Lb, Lf)
                y2 = _diag3(y1)
                y2 = y2.reshape(Wb, Hb, Wf, Hf).transpose(1, 0, 3, 2).reshape(Lb, Lf)
                return y2
            scores = jax.vmap(fuse_one)(scores)
        mm_col = mm.reshape(Lb, 1)
        s = scores * mm_col[None] * softmax_scale
        p = jax.nn.softmax(s, axis=1) * mm_col[None]
        Z = jnp.einsum('nlq,nlk->nqk', p, rp)                          # (N, Lf, K16)

    y = _fold_overlap_add(Z, N, C, Hf, Wf, rate, kernel)
    # TODO(synk): return_flow=True path (flow_to_image / compute_color) is
    # host-side numpy post-processing and is not translated to Pallas.
    return y.reshape(N, C, H, W), None


if __name__ == "__main__":
    key = jax.random.PRNGKey(0)
    kf, kb = jax.random.split(key)
    N, C, H, W = 2, 4, 16, 16
    f = jax.random.normal(kf, (N, C, H, W), jnp.float32)
    b = jax.random.normal(kb, (N, C, H, W), jnp.float32)

    y, _ = contextual_attention_forward(f, b, use_pallas=True)
    y = jax.block_until_ready(y)

    # pure-JAX reference of the same math (f32 throughout, original op order)
    y_ref, _ = contextual_attention_forward(f, b, use_pallas=False)
    y_ref = jax.block_until_ready(y_ref)

    assert y.shape == (N, C, H, W)
    max_err = float(jnp.max(jnp.abs(y - y_ref)))
    # the attention-weighted patch sum runs as a bf16 MXU matmul with bf16
    # output storage (+ approx reciprocal for the softmax denominator), which
    # introduces ~1e-2-level absolute differences vs. the f32 reference.
    assert np.allclose(np.asarray(y), np.asarray(y_ref), atol=5e-2, rtol=5e-2), max_err
    print("KERNEL_OK")
</pallas_src>

<mosaic_0001>
module attributes {stable_mosaic.version = 11 : i64} {
  func.func @_score_fuse_kernel(%arg0: i32, %arg1: memref<1x64x128xf32, #tpu.memory_space<vmem>>, %arg2: memref<1x128x128xf32, #tpu.memory_space<vmem>>, %arg3: memref<1x1x128xf32, #tpu.memory_space<vmem>>, %arg4: memref<1x64x128xf32, #tpu.memory_space<vmem>>) attributes {dimension_semantics = [#tpu.dimension_semantics<parallel>], iteration_bounds = array<i64: 2>, scalar_prefetch = 0 : i64, scratch_operands = 0 : i64, tpu.core_type = #tpu.core_type<tc>, window_params = [{transform_indices = @transform_0, window_bounds = array<i64: 1, 64, 128>}, {transform_indices = @transform_1, window_bounds = array<i64: 1, 128, 128>}, {transform_indices = @transform_2, window_bounds = array<i64: 1, 1, 128>}, {transform_indices = @transform_3, window_bounds = array<i64: 1, 64, 128>}]} {
    %c0 = arith.constant 0 : index
    %c0_0 = arith.constant 0 : index
    %c0_1 = arith.constant 0 : index
    %0 = vector.load %arg1[%c0, %c0_0, %c0_1] : memref<1x64x128xf32, #tpu.memory_space<vmem>>, vector<1x64x128xf32>
    %1 = vector.shape_cast %0 : vector<1x64x128xf32> to vector<64x128xf32>
    %c0_2 = arith.constant 0 : index
    %c0_3 = arith.constant 0 : index
    %c0_4 = arith.constant 0 : index
    %2 = vector.load %arg2[%c0_2, %c0_3, %c0_4] : memref<1x128x128xf32, #tpu.memory_space<vmem>>, vector<1x128x128xf32>
    %3 = vector.shape_cast %2 : vector<1x128x128xf32> to vector<128x128xf32>
    %cst = arith.constant dense<0.000000e+00> : vector<64x128xf32>
    %4 = tpu.matmul %1, %3, %cst {dimension_numbers = #tpu.dot_dimension_numbers<[1], [0], [0], [1], [0, 0, 1, 1], [], []>} : vector<64x128xf32>, vector<128x128xf32>, vector<64x128xf32> -> vector<64x128xf32>
    %c0_5 = arith.constant 0 : index
    %c0_6 = arith.constant 0 : index
    %c0_7 = arith.constant 0 : index
    %5 = vector.load %arg3[%c0_5, %c0_6, %c0_7] : memref<1x1x128xf32, #tpu.memory_space<vmem>>, vector<1x1x128xf32>
    %6 = vector.shape_cast %5 : vector<1x1x128xf32> to vector<1x128xf32>
    %cst_8 = arith.constant 1.000000e+01 : f32
    %7 = vector.broadcast %cst_8 : f32 to vector<1x128xf32>
    %8 = arith.mulf %6, %7 : vector<1x128xf32>
    %9 = vector.broadcast %8 : vector<1x128xf32> to vector<64x128xf32>
    %10 = arith.mulf %4, %9 : vector<64x128xf32>
    %11 = tpu.iota {dimensions = array<i32: 0>} : vector<64x128xi32>
    %12 = tpu.iota {dimensions = array<i32: 1>} : vector<64x128xi32>
    %c1_i32 = arith.constant 1 : i32
    %13 = tpu.dynamic_rotate %10 by %c1_i32 dim 0 : vector<64x128xf32>, i32 -> vector<64x128xf32>
    %c1_i32_9 = arith.constant 1 : i32
    %14 = tpu.dynamic_rotate %13 by %c1_i32_9 dim 1 : vector<64x128xf32>, i32 -> vector<64x128xf32>
    %c0_i32 = arith.constant 0 : i32
    %15 = vector.broadcast %c0_i32 : i32 to vector<64x128xi32>
    %16 = arith.cmpi eq, %11, %15 : vector<64x128xi32>
    %c0_i32_10 = arith.constant 0 : i32
    %17 = vector.broadcast %c0_i32_10 : i32 to vector<64x128xi32>
    %18 = arith.cmpi eq, %12, %17 : vector<64x128xi32>
    %19 = arith.ori %16, %18 : vector<64x128xi1>
    %cst_11 = arith.constant 0.000000e+00 : f32
    %20 = vector.broadcast %cst_11 : f32 to vector<64x128xf32>
    %21 = arith.select %19, %20, %14 : vector<64x128xi1>, vector<64x128xf32>
    %c63_i32 = arith.constant 63 : i32
    %22 = tpu.dynamic_rotate %10 by %c63_i32 dim 0 : vector<64x128xf32>, i32 -> vector<64x128xf32>
    %c127_i32 = arith.constant 127 : i32
    %23 = tpu.dynamic_rotate %22 by %c127_i32 dim 1 : vector<64x128xf32>, i32 -> vector<64x128xf32>
    %c63_i32_12 = arith.constant 63 : i32
    %24 = vector.broadcast %c63_i32_12 : i32 to vector<64x128xi32>
    %25 = arith.cmpi eq, %11, %24 : vector<64x128xi32>
    %c127_i32_13 = arith.constant 127 : i32
    %26 = vector.broadcast %c127_i32_13 : i32 to vector<64x128xi32>
    %27 = arith.cmpi eq, %12, %26 : vector<64x128xi32>
    %28 = arith.ori %25, %27 : vector<64x128xi1>
    %cst_14 = arith.constant 0.000000e+00 : f32
    %29 = vector.broadcast %cst_14 : f32 to vector<64x128xf32>
    %30 = arith.select %28, %29, %23 : vector<64x128xi1>, vector<64x128xf32>
    %31 = arith.addf %10, %21 : vector<64x128xf32>
    %32 = arith.addf %31, %30 : vector<64x128xf32>
    %c0_15 = arith.constant 0 : index
    %c0_16 = arith.constant 0 : index
    %c0_17 = arith.constant 0 : index
    %33 = vector.load %arg4[%c0_15, %c0_16, %c0_17] : memref<1x64x128xf32, #tpu.memory_space<vmem>>, vector<1x64x128xf32>
    %34 = vector.shape_cast %33 : vector<1x64x128xf32> to vector<64x128xf32>
    %35 = vector.shape_cast %32 : vector<64x128xf32> to vector<1x64x128xf32>
    tpu.vector_store %arg4[%c0_15, %c0_16, %c0_17], %35 {strides = array<i32>} : memref<1x64x128xf32, #tpu.memory_space<vmem>>, vector<1x64x128xf32>,
    return
  }
  func.func @transform_0(%arg0: i32) -> (i32, i32, i32) {
    %c0_i32 = arith.constant 0 : i32
    %c0_i32_0 = arith.constant 0 : i32
    %c0_i32_1 = arith.constant 0 : i32
    return %arg0, %c0_i32, %c0_i32_0 : i32, i32, i32
  }
  func.func @transform_1(%arg0: i32) -> (i32, i32, i32) {
    %c0_i32 = arith.constant 0 : i32
    %c0_i32_0 = arith.constant 0 : i32
    %c0_i32_1 = arith.constant 0 : i32
    return %arg0, %c0_i32, %c0_i32_0 : i32, i32, i32
  }
  func.func @transform_2(%arg0: i32) -> (i32, i32, i32) {
    %c0_i32 = arith.constant 0 : i32
    %c0_i32_0 = arith.constant 0 : i32
    %c0_i32_1 = arith.constant 0 : i32
    return %arg0, %c0_i32, %c0_i32_0 : i32, i32, i32
  }
  func.func @transform_3(%arg0: i32) -> (i32, i32, i32) {
    %c0_i32 = arith.constant 0 : i32
    %c0_i32_0 = arith.constant 0 : i32
    %c0_i32_1 = arith.constant 0 : i32
    return %arg0, %c0_i32, %c0_i32_0 : i32, i32, i32
  }
}

</mosaic_0001>

<llo_original>
// kernel: tpu_custom_call.1
$region0: #{tpu_custom_call.1}
  #allocation0 [shape = 'u32[]', space=smem, size = 0x4, offset = 0x4, fixed_abs, tag = 'smem constant byte address 0x4 - core index']
  #allocation1 [shape = 'u32[144,128]{1,0:T(1,128)}', space=vmem, size = 0x12000, scoped, tag = 'internal scratch']
  %s0 = inlined_call_operand.hbm [shape: f32[2,64,128], index: 0, kind: input, shape index: {}]
  %s1 = inlined_call_operand.hbm [shape: f32[2,128,128], index: 1, kind: input, shape index: {}]
  %s2 = inlined_call_operand.vmem [shape: f32[2,1,128], index: 2, kind: input, shape index: {}]
  %s3 = inlined_call_operand.hbm [shape: f32[2,64,128], index: 3, kind: output, shape index: {}]
  %s4 = sld [smem:[#allocation0]]
  $region53: #{tpu_custom_call.1} parent=0
    _
  %s6 = ssub.s32 1, %s4
  %s7 = scalar_select 0, %s6, %s4
  $region1: #{tpu_custom_call.1} parent=0
    #allocation2 [shape = 'u8[65536]{0}', space=vmem, size = 0x10000, scoped, tag = 'input window, operand 0']
    #allocation3 [shape = 's32[2]{0}', space=sflag, size = 0x8, scoped, tag = 'scoped memory for tpu_custom_call.1']
    #allocation4 [shape = 's32[2]{0}', space=sflag, size = 0x8, scoped, tag = 'scoped memory for tpu_custom_call.1']
    #allocation5 [shape = 'u8[131072]{0}', space=vmem, size = 0x20000, scoped, tag = 'input window, operand 1']
    #allocation6 [shape = 's32[2]{0}', space=sflag, size = 0x8, scoped, tag = 'scoped memory for tpu_custom_call.1']
    #allocation7 [shape = 'u8[65536]{0}', space=vmem, size = 0x10000, scoped, tag = 'output window, operand 0']
    %8 = vsyncpa [#allocation3], 0
    %s9 = scalar_lea.sflag [#allocation3], 1
    %10 = vsyncpa %s9, 0
    %11 = vsyncpa [#allocation6], 0
    %s12 = scalar_lea.sflag [#allocation6], 1
    %13 = vsyncpa %s12, 0
    %14 = vsyncpa [#allocation4], 0
    %s15 = scalar_lea.sflag [#allocation4], 1
    %16 = vsyncpa %s15, 0
    loop: start=0, step=1, limit=4
    $region2: #{tpu_custom_call.1} parent=1 // loop_pre_header
      _
    $region3: #{tpu_custom_call.1} parent=1 // loop_header
      %s18 = sphi 0, %s22
      %p19 = scmp.ge.s32.totalorder %s18, 4
      %s28 = sphi 0, %s30
      %s31 = sphi 0, %s28
      %s32 = sphi 0, %s31
      %s48 = sphi 0, %s32
      %s54 = sphi 0, %s56
      %s57 = sphi 0, %s54
      %s58 = sphi 0, %s57
      %s74 = sphi 0, %s58
      %s80 = sphi 0, %s82
      %s83 = sphi 0, %s80
      %s84 = sphi 0, %s83
      %s100 = sphi 0, %s84
      %s106 = sphi 0, %s108
      %s109 = sphi 0, %s106
      %s110 = sphi 0, %s109
      %s126 = sphi 0, %s110
    $region4: #{tpu_custom_call.1} parent=1 // loop_header_branch
      %21 = sbr.rel (%p19) target = $region8
    $region5: #{tpu_custom_call.1} parent=1 // loop_body
      %s23 = ssub.s32 %s18, 1
      %s24 = ssub.s32 %s18, 2
      %s25 = sadd.s32 %s18, 1
      %s26 = ssub.s32 %s18, %s25
      %p27 = scmp.eq.s32.totalorder %s26, 0
      %s29 = sadd.s32 %s28, 1
      %s30 = scalar_select %p27, %s28, %s29
      %p33 = pneg %p27
      %p34 = scmp.eq.s32.totalorder %s18, 1
      %p35 = por %p33, %p34
      %p36 = scmp.ne.s32.totalorder %s28, %s31
      %p37 = scmp.eq.s32.totalorder %s18, 0
      %p38 = por %p36, %p37
      %p39 = scmp.ne.s32.totalorder %s28, %s31
      %p40 = scmp.eq.s32.totalorder %s23, 1
      %p41 = por %p39, %p40
      %p42 = scmp.ne.s32.totalorder %s31, %s32
      %p43 = scmp.eq.s32.totalorder %s23, 0
      %p44 = por %p42, %p43
      %p45 = scmp.ne.s32.totalorder %s31, %s32
      %p46 = scmp.eq.s32.totalorder %s24, 1
      %p47 = por %p45, %p46
      %p49 = scmp.ne.s32.totalorder %s32, %s48
      %p50 = scmp.eq.s32.totalorder %s24, 0
      %p51 = por %p49, %p50
      %s52 = ssub.s32 %s18, %s25
      %p53 = scmp.eq.s32.totalorder %s52, 0
      %s55 = sadd.s32 %s54, 1
      %s56 = scalar_select %p53, %s54, %s55
      %p59 = pneg %p53
      %p60 = scmp.eq.s32.totalorder %s18, 1
      %p61 = por %p59, %p60
      %p62 = scmp.ne.s32.totalorder %s54, %s57
      %p63 = scmp.eq.s32.totalorder %s18, 0
      %p64 = por %p62, %p63
      %p65 = scmp.ne.s32.totalorder %s54, %s57
      %p66 = scmp.eq.s32.totalorder %s23, 1
      %p67 = por %p65, %p66
      %p68 = scmp.ne.s32.totalorder %s57, %s58
      %p69 = scmp.eq.s32.totalorder %s23, 0
      %p70 = por %p68, %p69
      %p71 = scmp.ne.s32.totalorder %s57, %s58
      %p72 = scmp.eq.s32.totalorder %s24, 1
      %p73 = por %p71, %p72
      %p75 = scmp.ne.s32.totalorder %s58, %s74
      %p76 = scmp.eq.s32.totalorder %s24, 0
      %p77 = por %p75, %p76
      %s78 = ssub.s32 %s18, %s25
      %p79 = scmp.eq.s32.totalorder %s78, 0
      %s81 = sadd.s32 %s80, 1
      %s82 = scalar_select %p79, %s80, %s81
      %p85 = pneg %p79
      %p86 = scmp.eq.s32.totalorder %s18, 1
      %p87 = por %p85, %p86
      %p88 = scmp.ne.s32.totalorder %s80, %s83
      %p89 = scmp.eq.s32.totalorder %s18, 0
      %p90 = por %p88, %p89
      %p91 = scmp.ne.s32.totalorder %s80, %s83
      %p92 = scmp.eq.s32.totalorder %s23, 1
      %p93 = por %p91, %p92
      %p94 = scmp.ne.s32.totalorder %s83, %s84
      %p95 = scmp.eq.s32.totalorder %s23, 0
      %p96 = por %p94, %p95
      %p97 = scmp.ne.s32.totalorder %s83, %s84
      %p98 = scmp.eq.s32.totalorder %s24, 1
      %p99 = por %p97, %p98
      %p101 = scmp.ne.s32.totalorder %s84, %s100
      %p102 = scmp.eq.s32.totalorder %s24, 0
      %p103 = por %p101, %p102
      %s104 = ssub.s32 %s18, %s25
      %p105 = scmp.eq.s32.totalorder %s104, 0
      %s107 = sadd.s32 %s106, 1
      %s108 = scalar_select %p105, %s106, %s107
      %p111 = pneg %p105
      %p112 = scmp.eq.s32.totalorder %s18, 1
      %p113 = por %p111, %p112
      %p114 = scmp.ne.s32.totalorder %s106, %s109
      %p115 = scmp.eq.s32.totalorder %s18, 0
      %p116 = por %p114, %p115
      %p117 = scmp.ne.s32.totalorder %s106, %s109
      %p118 = scmp.eq.s32.totalorder %s23, 1
      %p119 = por %p117, %p118
      %p120 = scmp.ne.s32.totalorder %s109, %s110
      %p121 = scmp.eq.s32.totalorder %s23, 0
      %p122 = por %p120, %p121
      %p123 = scmp.ne.s32.totalorder %s109, %s110
      %p124 = scmp.eq.s32.totalorder %s24, 1
      %p125 = por %p123, %p124
      %p127 = scmp.ne.s32.totalorder %s110, %s126
      %p128 = scmp.eq.s32.totalorder %s24, 0
      %p129 = por %p127, %p128
      %p130 = scmp.le.s32.totalorder 1, %s18
      %p131 = scmp.lt.s32.totalorder %s18, 3
      %p132 = pnand %p130, %p131
      %p133 = pneg %p132
      // Predicated region
      $region9: #{tpu_custom_call.1} parent=5 // pred_check
        _
      $region10: #{tpu_custom_call.1} parent=5 // pred_check_branch
        %135 = sbr.rel (%p132) target = $region12
      $region11: #{tpu_custom_call.1} parent=5 // pred_region
        %s136 = ssub.s32 %s18, 1
      $region12: #{tpu_custom_call.1} parent=5 // pred_fallthru
        _
      %p137 = scmp.lt.s32.totalorder %s18, 2
      // Predicated region
      $region13: #{tpu_custom_call.1} parent=5 // pred_check
        %p138 = pneg %p137
      $region14: #{tpu_custom_call.1} parent=5 // pred_check_branch
        %140 = sbr.rel (%p138) target = $region16
      $region15: #{tpu_custom_call.1} parent=5 // pred_region
        // Predicated region
        $region17: #{tpu_custom_call.1} parent=15 // pred_check
          %p141 = pneg %p38
        $region18: #{tpu_custom_call.1} parent=15 // pred_check_branch
          %143 = sbr.rel (%p141) target = $region20
        $region19: #{tpu_custom_call.1} parent=15 // pred_region
          %s144 = sand.u32 %s28, 1
          %s145 = scalar_lea.sflag [#allocation3], %s144
          %s146 = sand.u32 %s28, 1
          %s147 = smul.addr %s146, 64
          %s148 = scalar_lea.vmem [#allocation2], %s147
          %s150 = ssub.s32 1024, 1024
          %151 = vsyncadd %s145, %s150
          %s152 = smul.addr %s18, 8
          %s153 = smul.addr %s152, 128
          %s154 = scalar_lea.hbm %s0, %s153
          %s155 = sshll.u32 %s148, 4
          %s156 = int_to_ptr.vmem [resolvable:$true] %s155
          %161 = dma.hbm_to_vmem [thread:$0]  %s154, 1024, %s156, %s145, 128, 128, 8
        $region20: #{tpu_custom_call.1} parent=15 // pred_fallthru
          _
        // Predicated region
        $region21: #{tpu_custom_call.1} parent=15 // pred_check
          %p162 = pneg %p64
        $region22: #{tpu_custom_call.1} parent=15 // pred_check_branch
          %164 = sbr.rel (%p162) target = $region24
        $region23: #{tpu_custom_call.1} parent=15 // pred_region
          %s165 = sand.u32 %s54, 1
          %s166 = scalar_lea.sflag [#allocation6], %s165
          %s167 = sand.u32 %s54, 1
          %s168 = smul.addr %s167, 128
          %s169 = scalar_lea.vmem [#allocation5], %s168
          %s171 = ssub.s32 2048, 2048
          %172 = vsyncadd %s166, %s171
          %s173 = smul.addr %s18, 16
          %s174 = smul.addr %s173, 128
          %s175 = scalar_lea.hbm %s1, %s174
          %s176 = sshll.u32 %s169, 4
          %s177 = int_to_ptr.vmem [resolvable:$true] %s176
          %182 = dma.hbm_to_vmem [thread:$0]  %s175, 2048, %s177, %s166, 128, 128, 8
        $region24: #{tpu_custom_call.1} parent=15 // pred_fallthru
          _
        // Predicated region
        $region25: #{tpu_custom_call.1} parent=15 // pred_check
          %p183 = pneg %p90
        $region26: #{tpu_custom_call.1} parent=15 // pred_check_branch
          %185 = sbr.rel (%p183) target = $region28
        $region27: #{tpu_custom_call.1} parent=15 // pred_region
          %p186 = scmp.lt.s32.totalorder %s18, 1
          %s187 = scalar_select %p186, %s18, 1
          %s188 = scalar_lea.vmem %s2, %s187
        $region28: #{tpu_custom_call.1} parent=15 // pred_fallthru
          _
      $region16: #{tpu_custom_call.1} parent=5 // pred_fallthru
        _
      %p189 = scmp.le.s32.totalorder 1, %s18
      %p190 = scmp.lt.s32.totalorder %s18, 3
      %p191 = pnand %p189, %p190
      %p192 = pneg %p191
      // Predicated region
      $region29: #{tpu_custom_call.1} parent=5 // pred_check
        _
      $region30: #{tpu_custom_call.1} parent=5 // pred_check_branch
        %194 = sbr.rel (%p191) target = $region32
      $region31: #{tpu_custom_call.1} parent=5 // pred_region
        %s195 = ssub.s32 %s18, 1
        %s196 = sand.u32 %s31, 1
        %s197 = scalar_lea.sflag [#allocation3], %s196
        %s198 = sand.u32 %s31, 1
        %s199 = smul.addr %s198, 64
        %s200 = scalar_lea.vmem [#allocation2], %s199
        // Predicated region
        $region33: #{tpu_custom_call.1} parent=31 // pred_check
          %p201 = pneg %p44
        $region34: #{tpu_custom_call.1} parent=31 // pred_check_branch
          %203 = sbr.rel (%p201) target = $region36
        $region35: #{tpu_custom_call.1} parent=31 // pred_region
          %204 = dma.done %s197, 1024
        $region36: #{tpu_custom_call.1} parent=31 // pred_fallthru
          _
        %s205 = sand.u32 %s57, 1
        %s206 = scalar_lea.sflag [#allocation6], %s205
        %s207 = sand.u32 %s57, 1
        %s208 = smul.addr %s207, 128
        %s209 = scalar_lea.vmem [#allocation5], %s208
        // Predicated region
        $region37: #{tpu_custom_call.1} parent=31 // pred_check
          %p210 = pneg %p70
        $region38: #{tpu_custom_call.1} parent=31 // pred_check_branch
          %212 = sbr.rel (%p210) target = $region40
        $region39: #{tpu_custom_call.1} parent=31 // pred_region
          %213 = dma.done %s206, 2048
        $region40: #{tpu_custom_call.1} parent=31 // pred_fallthru
          _
        %s214 = sand.u32 %s31, 1
        %s215 = scalar_lea.sflag [#allocation3], %s214
        %s216 = sand.u32 %s31, 1
        %s217 = smul.addr %s216, 64
        %s218 = scalar_lea.vmem [#allocation2], %s217
        %p219 = pneg %p44
        %p220 = pneg %p41
        %s221 = sand.u32 %s57, 1
        %s222 = scalar_lea.sflag [#allocation6], %s221
        %s223 = sand.u32 %s57, 1
        %s224 = smul.addr %s223, 128
        %s225 = scalar_lea.vmem [#allocation5], %s224
        %p226 = pneg %p70
        %p227 = pneg %p67
        %p228 = scmp.lt.s32.totalorder %s23, 1
        %s229 = scalar_select %p228, %s23, 1
        %s230 = scalar_lea.vmem %s2, %s229
        %p231 = pneg %p96
        %p232 = pneg %p93
        %p233 = pneg %p122
        %p234 = pneg %p119
        %s235 = sand.u32 %s109, 1
        %s236 = scalar_lea.sflag [#allocation4], %s235
        %s237 = sand.u32 %s109, 1
        %s238 = smul.addr %s237, 64
        %s239 = scalar_lea.vmem [#allocation7], %s238
        %p240 = scmp.lt.s32.totalorder %s23, 1
        %s241 = scalar_select %p240, %s23, 1
        %s242 = scalar_lea.vmem %s2, %s241
        %v243 = vld [vmem:[%s200] sm:$0xff]
        %v244 = vld [vmem:[%s200 + $0x8] sm:$0xff]
        %v245 = vld [vmem:[%s200 + $0x10] sm:$0xff]
        %v246 = vld [vmem:[%s200 + $0x18] sm:$0xff]
        %v247 = vld [vmem:[%s200 + $0x20] sm:$0xff]
        %v248 = vld [vmem:[%s200 + $0x28] sm:$0xff]
        %v249 = vld [vmem:[%s200 + $0x30] sm:$0xff]
        %v250 = vld [vmem:[%s200 + $0x38] sm:$0xff]
        %v251 = vld [vmem:[%s209] sm:$0xff]
        %v252 = vld [vmem:[%s209 + $0x8] sm:$0xff]
        %v253 = vld [vmem:[%s209 + $0x10] sm:$0xff]
        %v254 = vld [vmem:[%s209 + $0x18] sm:$0xff]
        %v255 = vld [vmem:[%s209 + $0x20] sm:$0xff]
        %v256 = vld [vmem:[%s209 + $0x28] sm:$0xff]
        %v257 = vld [vmem:[%s209 + $0x30] sm:$0xff]
        %v258 = vld [vmem:[%s209 + $0x38] sm:$0xff]
        %v259 = vld [vmem:[%s209 + $0x40] sm:$0xff]
        %v260 = vld [vmem:[%s209 + $0x48] sm:$0xff]
        %v261 = vld [vmem:[%s209 + $0x50] sm:$0xff]
        %v262 = vld [vmem:[%s209 + $0x58] sm:$0xff]
        %v263 = vld [vmem:[%s209 + $0x60] sm:$0xff]
        %v264 = vld [vmem:[%s209 + $0x68] sm:$0xff]
        %v265 = vld [vmem:[%s209 + $0x70] sm:$0xff]
        %v266 = vld [vmem:[%s209 + $0x78] sm:$0xff]
        %267 = vmatprep.subr.mxu0 0.0
        %268 = vmatpush1.msra.mxu0 %v251
        %269 = vmatprep.subr.mxu0 0.0
        %270 = vmatpush1.msra.mxu0 %v252
        %271 = vmatprep.subr.mxu0 0.0
        %272 = vmatpush1.msra.mxu0 %v253
        %273 = vmatprep.subr.mxu0 0.0
        %274 = vmatpush1.msra.mxu0 %v254
        %275 = vmatprep.subr.mxu0 0.0
        %276 = vmatpush1.msra.mxu0 %v255
        %277 = vmatprep.subr.mxu0 0.0
        %278 = vmatpush1.msra.mxu0 %v256
        %279 = vmatprep.subr.mxu0 0.0
        %280 = vmatpush1.msra.mxu0 %v257
        %281 = vmatprep.subr.mxu0 0.0
        %282 = vmatpush1.msra.mxu0 %v258
        %283 = vmatprep.subr.mxu0 0.0
        %284 = vmatpush1.msra.mxu0 %v259
        %285 = vmatprep.subr.mxu0 0.0
        %286 = vmatpush1.msra.mxu0 %v260
        %287 = vmatprep.subr.mxu0 0.0
        %288 = vmatpush1.msra.mxu0 %v261
        %289 = vmatprep.subr.mxu0 0.0
        %290 = vmatpush1.msra.mxu0 %v262
        %291 = vmatprep.subr.mxu0 0.0
        %292 = vmatpush1.msra.mxu0 %v263
        %293 = vmatprep.subr.mxu0 0.0
        %294 = vmatpush1.msra.mxu0 %v264
        %295 = vmatprep.subr.mxu0 0.0
        %296 = vmatpush1.msra.mxu0 %v265
        %297 = vmatprep.subr.mxu0 0.0
        %298 = vmatpush1.msra.mxu0 %v266
        %299 = vmatprep.subr.mxu0 0.0
        %300 = vmatpush1.msra.mxu0 0.0
        %301 = vmatprep.subr.mxu0 0.0
        %302 = vmatpush1.msra.mxu0 0.0
        %303 = vmatprep.subr.mxu0 0.0
        %304 = vmatpush1.msra.mxu0 0.0
        %305 = vmatprep.subr.mxu0 0.0
        %306 = vmatpush1.msra.mxu0 0.0
        %307 = vmatprep.subr.mxu0 0.0
        %308 = vmatpush1.msra.mxu0 0.0
        %309 = vmatprep.subr.mxu0 0.0
        %310 = vmatpush1.msra.mxu0 0.0
        %311 = vmatprep.subr.mxu0 0.0
        %312 = vmatpush1.msra.mxu0 0.0
        %313 = vmatprep.subr.mxu0 0.0
        %314 = vmatpush1.msra.mxu0 0.0
        %315 = vmatprep.subr.mxu0 0.0
        %316 = vmatpush1.msra.mxu0 0.0
        %317 = vmatprep.subr.mxu0 0.0
        %318 = vmatpush1.msra.mxu0 0.0
        %319 = vmatprep.subr.mxu0 0.0
        %320 = vmatpush1.msra.mxu0 0.0
        %321 = vmatprep.subr.mxu0 0.0
        %322 = vmatpush1.msra.mxu0 0.0
        %323 = vmatprep.subr.mxu0 0.0
        %324 = vmatpush1.msra.mxu0 0.0
        %325 = vmatprep.subr.mxu0 0.0
        %326 = vmatpush1.msra.mxu0 0.0
        %327 = vmatprep.subr.mxu0 0.0
        %328 = vmatpush1.msra.mxu0 0.0
        %329 = vmatprep.subr.mxu0 0.0
        %330 = vmatpush1.msra.mxu0 0.0
        %331 = vmatprep.mubr.f32.mxu0 0.0
        %332 = vmatmul.mubr.f32.gmra.mrb[0].mxu0 %v243
        %v333 = vpop.f32.mrb[0].mxu0
        %v334 = vadd.f32 0.0, %v333
        %v335 = vpop.f32.mrb[0].mxu0
        %336 = vmatprep.mubr.f32.mxu0 0.0
        %337 = vmatmul.mubr.f32.gmra.mrb[0].mxu0 %v244
        %v338 = vpop.f32.mrb[0].mxu0
        %v339 = vadd.f32 0.0, %v338
        %v340 = vpop.f32.mrb[0].mxu0
        %341 = vmatprep.mubr.f32.mxu0 0.0
        %342 = vmatmul.mubr.f32.gmra.mrb[0].mxu0 %v245
        %v343 = vpop.f32.mrb[0].mxu0
        %v344 = vadd.f32 0.0, %v343
        %v345 = vpop.f32.mrb[0].mxu0
        %346 = vmatprep.mubr.f32.mxu0 0.0
        %347 = vmatmul.mubr.f32.gmra.mrb[0].mxu0 %v246
        %v348 = vpop.f32.mrb[0].mxu0
        %v349 = vadd.f32 0.0, %v348
        %v350 = vpop.f32.mrb[0].mxu0
        %351 = vmatprep.mubr.f32.mxu0 0.0
        %352 = vmatmul.mubr.f32.gmra.mrb[0].mxu0 %v247
        %v353 = vpop.f32.mrb[0].mxu0
        %v354 = vadd.f32 0.0, %v353
        %v355 = vpop.f32.mrb[0].mxu0
        %356 = vmatprep.mubr.f32.mxu0 0.0
        %357 = vmatmul.mubr.f32.gmra.mrb[0].mxu0 %v248
        %v358 = vpop.f32.mrb[0].mxu0
        %v359 = vadd.f32 0.0, %v358
        %v360 = vpop.f32.mrb[0].mxu0
        %361 = vmatprep.mubr.f32.mxu0 0.0
        %362 = vmatmul.mubr.f32.gmra.mrb[0].mxu0 %v249
        %v363 = vpop.f32.mrb[0].mxu0
        %v364 = vadd.f32 0.0, %v363
        %v365 = vpop.f32.mrb[0].mxu0
        %366 = vmatprep.mubr.f32.mxu0 0.0
        %367 = vmatmul.mubr.f32.gmra.mrb[0].mxu0 %v250
        %v368 = vpop.f32.mrb[0].mxu0
        %v369 = vadd.f32 0.0, %v368
        %v370 = vpop.f32.mrb[0].mxu0
        %371 = vdwg.mxu0
        %v372 = vld [vmem:[%s242] sm:$0x1]
        %v373 = vmul.f32 %v372, 10.0
        %v375 = vlaneseq
        %v376 = vshrl.u32 %v375, 7
        %v377 = vsub.s32 0, %v376
        %v378 = vrot.slane %v373, %v377
        %v380 = vmul.f32 %v334, %v378
        %v381 = vmul.f32 %v339, %v378
        %v382 = vmul.f32 %v344, %v378
        %v383 = vmul.f32 %v349, %v378
        %v384 = vmul.f32 %v354, %v378
        %v385 = vmul.f32 %v359, %v378
        %v386 = vmul.f32 %v364, %v378
        %v387 = vmul.f32 %v369, %v378
        %v388 = vlaneseq
        %v389 = vshrl.u32 %v388, 7
        %v390 = vadd.s32 %v389, 8
        %v391 = vadd.s32 %v389, 16
        %v392 = vadd.s32 %v389, 24
        %v393 = vadd.s32 %v389, 32
        %v394 = vadd.s32 %v389, 40
        %v395 = vadd.s32 %v389, 48
        %v396 = vadd.s32 %v389, 56
        %v397 = vlaneseq
        %v398 = vand.u32 %v397, 127
        %v399 = vrot.slane %v380, 7
        %v400 = vrot.slane %v381, 7
        %v401 = vrot.slane %v382, 7
        %v402 = vrot.slane %v383, 7
        %v403 = vrot.slane %v384, 7
        %v404 = vrot.slane %v385, 7
        %v405 = vrot.slane %v386, 7
        %v406 = vrot.slane %v387, 7
        %vm407 = vcmp.lt.s32.totalorder %v389, 1
        %v408 = vsel %vm407, %v405, %v406
        %v409 = vsel %vm407, %v404, %v405
        %v410 = vsel %vm407, %v403, %v404
        %v411 = vsel %vm407, %v402, %v403
        %v412 = vsel %vm407, %v401, %v402
        %v413 = vsel %vm407, %v400, %v401
        %v414 = vsel %vm407, %v399, %v400
        %v415 = vsel %vm407, %v406, %v399
        %416 = vrot.lane.b32.xlu0 %v415, 1
        %v417 = vpop.permute.xlu0 %416
        %418 = vrot.lane.b32.xlu0 %v414, 1
        %v419 = vpop.permute.xlu0 %418
        %420 = vrot.lane.b32.xlu0 %v413, 1
        %v421 = vpop.permute.xlu0 %420
        %422 = vrot.lane.b32.xlu0 %v412, 1
        %v423 = vpop.permute.xlu0 %422
        %424 = vrot.lane.b32.xlu0 %v411, 1
        %v425 = vpop.permute.xlu0 %424
        %426 = vrot.lane.b32.xlu0 %v410, 1
        %v427 = vpop.permute.xlu0 %426
        %428 = vrot.lane.b32.xlu0 %v409, 1
        %v429 = vpop.permute.xlu0 %428
        %430 = vrot.lane.b32.xlu0 %v408, 1
        %v431 = vpop.permute.xlu0 %430
        %vm432 = vcmp.eq.s32.totalorder %v389, 0
        %vm433 = vcmp.eq.s32.totalorder %v390, 0
        %vm434 = vcmp.eq.s32.totalorder %v391, 0
        %vm435 = vcmp.eq.s32.totalorder %v392, 0
        %vm436 = vcmp.eq.s32.totalorder %v393, 0
        %vm437 = vcmp.eq.s32.totalorder %v394, 0
        %vm438 = vcmp.eq.s32.totalorder %v395, 0
        %vm439 = vcmp.eq.s32.totalorder %v396, 0
        %vm440 = vcmp.eq.s32.totalorder %v398, 0
        %vm441 = vmor %vm432, %vm440
        %vm442 = vmor %vm433, %vm440
        %vm443 = vmor %vm434, %vm440
        %vm444 = vmor %vm435, %vm440
        %vm445 = vmor %vm436, %vm440
        %vm446 = vmor %vm437, %vm440
        %vm447 = vmor %vm438, %vm440
        %vm448 = vmor %vm439, %vm440
        %v449 = vsel %vm441, 0.0, %v417
        %v450 = vsel %vm442, 0.0, %v419
        %v451 = vsel %vm443, 0.0, %v421
        %v452 = vsel %vm444, 0.0, %v423
        %v453 = vsel %vm445, 0.0, %v425
        %v454 = vsel %vm446, 0.0, %v427
        %v455 = vsel %vm447, 0.0, %v429
        %v456 = vsel %vm448, 0.0, %v431
        %v457 = vrot.slane %v380, 1
        %v458 = vrot.slane %v381, 1
        %v459 = vrot.slane %v382, 1
        %v460 = vrot.slane %v383, 1
        %v461 = vrot.slane %v384, 1
        %v462 = vrot.slane %v385, 1
        %v463 = vrot.slane %v386, 1
        %v464 = vrot.slane %v387, 1
        %vm465 = vcmp.lt.s32.totalorder %v389, 7
        %v466 = vsel %vm465, %v463, %v464
        %v467 = vsel %vm465, %v462, %v463
        %v468 = vsel %vm465, %v461, %v462
        %v469 = vsel %vm465, %v460, %v461
        %v470 = vsel %vm465, %v459, %v460
        %v471 = vsel %vm465, %v458, %v459
        %v472 = vsel %vm465, %v457, %v458
        %v473 = vsel %vm465, %v464, %v457
        %474 = vrot.lane.b32.xlu0 %v472, 127
        %v475 = vpop.permute.xlu0 %474
        %476 = vrot.lane.b32.xlu0 %v471, 127
        %v477 = vpop.permute.xlu0 %476
        %478 = vrot.lane.b32.xlu0 %v470, 127
        %v479 = vpop.permute.xlu0 %478
        %480 = vrot.lane.b32.xlu0 %v469, 127
        %v481 = vpop.permute.xlu0 %480
        %482 = vrot.lane.b32.xlu0 %v468, 127
        %v483 = vpop.permute.xlu0 %482
        %484 = vrot.lane.b32.xlu0 %v467, 127
        %v485 = vpop.permute.xlu0 %484
        %486 = vrot.lane.b32.xlu0 %v466, 127
        %v487 = vpop.permute.xlu0 %486
        %488 = vrot.lane.b32.xlu0 %v473, 127
        %v489 = vpop.permute.xlu0 %488
        %vm490 = vcmp.eq.s32.totalorder %v389, 63
        %vm491 = vcmp.eq.s32.totalorder %v390, 63
        %vm492 = vcmp.eq.s32.totalorder %v391, 63
        %vm493 = vcmp.eq.s32.totalorder %v392, 63
        %vm494 = vcmp.eq.s32.totalorder %v393, 63
        %vm495 = vcmp.eq.s32.totalorder %v394, 63
        %vm496 = vcmp.eq.s32.totalorder %v395, 63
        %vm497 = vcmp.eq.s32.totalorder %v396, 63
        %vm498 = vcmp.eq.s32.totalorder %v398, 127
        %vm499 = vmor %vm490, %vm498
        %vm500 = vmor %vm491, %vm498
        %vm501 = vmor %vm492, %vm498
        %vm502 = vmor %vm493, %vm498
        %vm503 = vmor %vm494, %vm498
        %vm504 = vmor %vm495, %vm498
        %vm505 = vmor %vm496, %vm498
        %vm506 = vmor %vm497, %vm498
        %v507 = vsel %vm499, 0.0, %v475
        %v508 = vsel %vm500, 0.0, %v477
        %v509 = vsel %vm501, 0.0, %v479
        %v510 = vsel %vm502, 0.0, %v481
        %v511 = vsel %vm503, 0.0, %v483
        %v512 = vsel %vm504, 0.0, %v485
        %v513 = vsel %vm505, 0.0, %v487
        %v514 = vsel %vm506, 0.0, %v489
        %v515 = vadd.f32 %v380, %v449
        %v516 = vadd.f32 %v381, %v450
        %v517 = vadd.f32 %v382, %v451
        %v518 = vadd.f32 %v383, %v452
        %v519 = vadd.f32 %v384, %v453
        %v520 = vadd.f32 %v385, %v454
        %v521 = vadd.f32 %v386, %v455
        %v522 = vadd.f32 %v387, %v456
        %v523 = vadd.f32 %v515, %v507
        %v524 = vadd.f32 %v516, %v508
        %v525 = vadd.f32 %v517, %v509
        %v526 = vadd.f32 %v518, %v510
        %v527 = vadd.f32 %v519, %v511
        %v528 = vadd.f32 %v520, %v512
        %v529 = vadd.f32 %v521, %v513
        %v530 = vadd.f32 %v522, %v514
        %531 = vst [vmem:[%s239] sm:$0xff] %v523
        %532 = vst [vmem:[%s239 + $0x8] sm:$0xff] %v524
        %533 = vst [vmem:[%s239 + $0x10] sm:$0xff] %v525
        %534 = vst [vmem:[%s239 + $0x18] sm:$0xff] %v526
        %535 = vst [vmem:[%s239 + $0x20] sm:$0xff] %v527
        %536 = vst [vmem:[%s239 + $0x28] sm:$0xff] %v528
        %537 = vst [vmem:[%s239 + $0x30] sm:$0xff] %v529
        %538 = vst [vmem:[%s239 + $0x38] sm:$0xff] %v530
        %s539 = sand.u32 %s109, 1
        %s540 = scalar_lea.sflag [#allocation4], %s539
        %s541 = sand.u32 %s109, 1
        %s542 = smul.addr %s541, 64
        %s543 = scalar_lea.vmem [#allocation7], %s542
        // Predicated region
        $region41: #{tpu_custom_call.1} parent=31 // pred_check
          %p544 = pneg %p119
        $region42: #{tpu_custom_call.1} parent=31 // pred_check_branch
          %546 = sbr.rel (%p544) target = $region44
        $region43: #{tpu_custom_call.1} parent=31 // pred_region
          %s548 = ssub.s32 1024, 1024
          %549 = vsyncadd %s540, %s548
          %s550 = smul.addr %s23, 8
          %s551 = smul.addr %s550, 128
          %s552 = scalar_lea.hbm %s3, %s551
          %s553 = sshll.u32 %s543, 4
          %s554 = int_to_ptr.vmem [resolvable:$true] %s553
          %559 = dma.vmem_to_hbm [thread:$0]  %s554, 1024, %s552, %s540, 128, 128, 8
        $region44: #{tpu_custom_call.1} parent=31 // pred_fallthru
          _
      $region32: #{tpu_custom_call.1} parent=5 // pred_fallthru
        _
      %p560 = scmp.le.s32.totalorder 2, %s18
      // Predicated region
      $region45: #{tpu_custom_call.1} parent=5 // pred_check
        %p561 = pneg %p560
      $region46: #{tpu_custom_call.1} parent=5 // pred_check_branch
        %563 = sbr.rel (%p561) target = $region48
      $region47: #{tpu_custom_call.1} parent=5 // pred_region
        %s564 = ssub.s32 %s18, 2
        // Predicated region
        $region49: #{tpu_custom_call.1} parent=47 // pred_check
          %p565 = pneg %p125
        $region50: #{tpu_custom_call.1} parent=47 // pred_check_branch
          %567 = sbr.rel (%p565) target = $region52
        $region51: #{tpu_custom_call.1} parent=47 // pred_region
          %s568 = sand.u32 %s110, 1
          %s569 = scalar_lea.sflag [#allocation4], %s568
          %s570 = sand.u32 %s110, 1
          %s571 = smul.addr %s570, 64
          %s572 = scalar_lea.vmem [#allocation7], %s571
          %573 = dma.done %s569, 1024
        $region52: #{tpu_custom_call.1} parent=47 // pred_fallthru
          _
      $region48: #{tpu_custom_call.1} parent=5 // pred_fallthru
        _
    $region6: #{tpu_custom_call.1} parent=1 // loop_footer
      %s22 = sadd.s32 1, %s18
    $region7: #{tpu_custom_call.1} parent=1 // loop_footer_branch
      %17 = sbr.rel target = $region3
    $region8: #{tpu_custom_call.1} parent=1 // loop_exit
      _
    %574 = vsyncpa [#allocation3], 1
    %s575 = scalar_lea.sflag [#allocation3], 1
    %576 = vsyncpa %s575, 1
    %577 = vsyncpa [#allocation6], 1
    %s578 = scalar_lea.sflag [#allocation6], 1
    %579 = vsyncpa %s578, 1
    %580 = vsyncpa [#allocation4], 1
    %s581 = scalar_lea.sflag [#allocation4], 1
    %582 = vsyncpa %s581, 1

</llo_original>
